<compile_context>
chip_gen: v7x
topology: tpu7x:2x2x1
jax: 0.10.0
libtpu: 0.0.40
codegen_flags: <defaults>
</compile_context>

<pallas_src>
import functools

import jax
import jax.numpy as jnp
from jax import lax
from jax.experimental import pallas as pl
from jax.experimental.pallas import tpu as pltpu


def _round_up(x, m):
    return ((x + m - 1) // m) * m


def _noisy_linear_kernel(x_ref, mu_ref, sigma_ref, eps_ref, o_ref, acc_ref,
                         *, compute_dtype):
    """Computes one (TM, TN) output tile, accumulating over the K grid axis."""
    k = pl.program_id(2)

    @pl.when(k == 0)
    def _():
        acc_ref[...] = jnp.zeros_like(acc_ref)

    # Effective noisy weight tile, built in f32 on the VPU.
    w = mu_ref[...] + sigma_ref[...] * eps_ref[...]          # (TN, TK)
    x = x_ref[...]                                            # (TM, TK)
    if jnp.dtype(compute_dtype) != jnp.dtype(jnp.float32):
        # bf16 MXU operands with f32 accumulation (v6e/v7x fast path).
        w = w.astype(compute_dtype)
        x = x.astype(compute_dtype)

    # Contract x (TM, TK) with w (TN, TK) over the in_features axis directly;
    # no transposed weight copy is materialized.
    acc_ref[...] += lax.dot_general(
        x, w,
        dimension_numbers=(((1,), (1,)), ((), ())),
        preferred_element_type=jnp.float32)

    @pl.when(k == pl.num_programs(2) - 1)
    def _():
        o_ref[...] = acc_ref[...].astype(o_ref.dtype)


def noisy_linear(x, mu_weight, sigma_weight, epsilon_weight,
                 *, tm=128, tn=256, tk=256, compute_dtype=jnp.float32):
    """y = x @ (mu_weight + sigma_weight * epsilon_weight).T  (all f32 output)."""
    batch, in_features = x.shape
    out_features, in_features_w = mu_weight.shape
    assert in_features == in_features_w
    assert sigma_weight.shape == mu_weight.shape
    assert epsilon_weight.shape == mu_weight.shape

    # Clamp tiles to the (hardware-aligned) problem size.
    tm = min(tm, _round_up(batch, 8))
    tn = min(tn, _round_up(out_features, 128))
    tk = min(tk, _round_up(in_features, 128))

    # Zero-pad to tile multiples (exact for this matmul); keeps output tiles
    # lane-dense and every block (8, 128)-aligned.
    mp = _round_up(batch, tm)
    np_ = _round_up(out_features, tn)
    kp = _round_up(in_features, tk)

    if (mp, kp) != (batch, in_features):
        x = jnp.pad(x, ((0, mp - batch), (0, kp - in_features)))
    if (np_, kp) != (out_features, in_features):
        pad_w = ((0, np_ - out_features), (0, kp - in_features))
        mu_weight = jnp.pad(mu_weight, pad_w)
        sigma_weight = jnp.pad(sigma_weight, pad_w)
        epsilon_weight = jnp.pad(epsilon_weight, pad_w)

    grid = (mp // tm, np_ // tn, kp // tk)

    x_spec = pl.BlockSpec((tm, tk), lambda i, j, k: (i, k))
    w_spec = pl.BlockSpec((tn, tk), lambda i, j, k: (j, k))
    o_spec = pl.BlockSpec((tm, tn), lambda i, j, k: (i, j))

    out = pl.pallas_call(
        functools.partial(_noisy_linear_kernel, compute_dtype=compute_dtype),
        out_shape=jax.ShapeDtypeStruct((mp, np_), jnp.float32),
        grid_spec=pltpu.PrefetchScalarGridSpec(
            num_scalar_prefetch=0,
            grid=grid,
            in_specs=[x_spec, w_spec, w_spec, w_spec],
            out_specs=o_spec,
            scratch_shapes=[pltpu.VMEM((tm, tn), jnp.float32)]),
        compiler_params=pltpu.CompilerParams(
            dimension_semantics=("parallel", "parallel", "arbitrary")),
    )(x, mu_weight, sigma_weight, epsilon_weight)

    if (mp, np_) != (batch, out_features):
        out = out[:batch, :out_features]
    return out


def _reference(x, mu_weight, sigma_weight, epsilon_weight):
    return x @ (mu_weight + sigma_weight * epsilon_weight).T


if __name__ == "__main__":
    # Small but hardware-friendly shapes (multiple K and N tiles are exercised).
    batch, in_features, out_features = 16, 512, 512

    key = jax.random.PRNGKey(0)
    k_x, k_mu, k_eps = jax.random.split(key, 3)

    x = jax.random.normal(k_x, (batch, in_features), dtype=jnp.float32)

    # Deterministic init mirroring reset_parameters():
    #   mu ~ U(-0.2, 0.2), sigma = 0.017, epsilon ~ N(0, 1) (noise buffer).
    mu_weight = jax.random.uniform(
        k_mu, (out_features, in_features), minval=-0.2, maxval=0.2,
        dtype=jnp.float32)
    sigma_weight = jnp.full((out_features, in_features), 0.017, dtype=jnp.float32)
    epsilon_weight = jax.random.normal(
        k_eps, (out_features, in_features), dtype=jnp.float32)

    y_ref = _reference(x, mu_weight, sigma_weight, epsilon_weight)

    # Exact f32-operand path.
    y = jax.block_until_ready(
        noisy_linear(x, mu_weight, sigma_weight, epsilon_weight))
    assert y.shape == (batch, out_features)
    assert jnp.allclose(y, y_ref, atol=1e-4, rtol=1e-4)

    # bf16 MXU-operand path (f32 accumulation) — looser tolerance expected.
    y_bf16 = jax.block_until_ready(
        noisy_linear(x, mu_weight, sigma_weight, epsilon_weight,
                     compute_dtype=jnp.bfloat16))
    assert y_bf16.shape == (batch, out_features)
    assert jnp.allclose(y_bf16, y_ref, atol=1e-1, rtol=3e-2)

    print("KERNEL_OK")
</pallas_src>

<mosaic_0001>
module attributes {stable_mosaic.version = 11 : i64} {
  func.func @_noisy_linear_kernel(%arg0: i32, %arg1: i32, %arg2: i32, %arg3: memref<16x256xf32, #tpu.memory_space<vmem>>, %arg4: memref<256x256xf32, #tpu.memory_space<vmem>>, %arg5: memref<256x256xf32, #tpu.memory_space<vmem>>, %arg6: memref<256x256xf32, #tpu.memory_space<vmem>>, %arg7: memref<16x256xf32, #tpu.memory_space<vmem>>, %arg8: memref<16x256xf32, #tpu.memory_space<vmem>>) attributes {dimension_semantics = [#tpu.dimension_semantics<parallel>, #tpu.dimension_semantics<parallel>, #tpu.dimension_semantics<arbitrary>], iteration_bounds = array<i64: 1, 2, 2>, scalar_prefetch = 0 : i64, scratch_operands = 1 : i64, tpu.core_type = #tpu.core_type<tc>, window_params = [{transform_indices = @transform_0, window_bounds = array<i64: 16, 256>}, {transform_indices = @transform_1, window_bounds = array<i64: 256, 256>}, {transform_indices = @transform_2, window_bounds = array<i64: 256, 256>}, {transform_indices = @transform_3, window_bounds = array<i64: 256, 256>}, {transform_indices = @transform_4, window_bounds = array<i64: 16, 256>}]} {
    %c0_i32 = arith.constant 0 : i32
    %0 = arith.cmpi eq, %arg2, %c0_i32 : i32
    %1 = arith.extui %0 : i1 to i32
    %c0_i32_0 = arith.constant 0 : i32
    %2 = arith.cmpi ne, %1, %c0_i32_0 : i32
    scf.if %2 {
      %cst_13 = arith.constant 0.000000e+00 : f32
      %16 = vector.broadcast %cst_13 : f32 to vector<16x256xf32>
      %c0_14 = arith.constant 0 : index
      %c0_15 = arith.constant 0 : index
      %17 = vector.load %arg8[%c0_14, %c0_15] : memref<16x256xf32, #tpu.memory_space<vmem>>, vector<16x256xf32>
      tpu.vector_store %arg8[%c0_14, %c0_15], %16 {strides = array<i32>} : memref<16x256xf32, #tpu.memory_space<vmem>>, vector<16x256xf32>,
    } else {
    }
    %c0 = arith.constant 0 : index
    %c0_1 = arith.constant 0 : index
    %3 = vector.load %arg4[%c0, %c0_1] : memref<256x256xf32, #tpu.memory_space<vmem>>, vector<256x256xf32>
    %c0_2 = arith.constant 0 : index
    %c0_3 = arith.constant 0 : index
    %4 = vector.load %arg5[%c0_2, %c0_3] : memref<256x256xf32, #tpu.memory_space<vmem>>, vector<256x256xf32>
    %c0_4 = arith.constant 0 : index
    %c0_5 = arith.constant 0 : index
    %5 = vector.load %arg6[%c0_4, %c0_5] : memref<256x256xf32, #tpu.memory_space<vmem>>, vector<256x256xf32>
    %6 = arith.mulf %4, %5 : vector<256x256xf32>
    %7 = arith.addf %3, %6 : vector<256x256xf32>
    %c0_6 = arith.constant 0 : index
    %c0_7 = arith.constant 0 : index
    %8 = vector.load %arg3[%c0_6, %c0_7] : memref<16x256xf32, #tpu.memory_space<vmem>>, vector<16x256xf32>
    %c0_8 = arith.constant 0 : index
    %c0_9 = arith.constant 0 : index
    %9 = vector.load %arg8[%c0_8, %c0_9] : memref<16x256xf32, #tpu.memory_space<vmem>>, vector<16x256xf32>
    %cst = arith.constant dense<0.000000e+00> : vector<16x256xf32>
    %10 = tpu.matmul %8, %7, %cst {dimension_numbers = #tpu.dot_dimension_numbers<[1], [1], [0], [0], [0, 0, 1, 0], [], []>} : vector<16x256xf32>, vector<256x256xf32>, vector<16x256xf32> -> vector<16x256xf32>
    %11 = arith.addf %9, %10 : vector<16x256xf32>
    %c0_10 = arith.constant 0 : index
    %c0_11 = arith.constant 0 : index
    %12 = vector.load %arg8[%c0_10, %c0_11] : memref<16x256xf32, #tpu.memory_space<vmem>>, vector<16x256xf32>
    tpu.vector_store %arg8[%c0_10, %c0_11], %11 {strides = array<i32>} : memref<16x256xf32, #tpu.memory_space<vmem>>, vector<16x256xf32>,
    %c1_i32 = arith.constant 1 : i32
    %13 = arith.cmpi eq, %arg2, %c1_i32 : i32
    %14 = arith.extui %13 : i1 to i32
    %c0_i32_12 = arith.constant 0 : i32
    %15 = arith.cmpi ne, %14, %c0_i32_12 : i32
    scf.if %15 {
      %c0_13 = arith.constant 0 : index
      %c0_14 = arith.constant 0 : index
      %16 = vector.load %arg8[%c0_13, %c0_14] : memref<16x256xf32, #tpu.memory_space<vmem>>, vector<16x256xf32>
      %c0_15 = arith.constant 0 : index
      %c0_16 = arith.constant 0 : index
      %17 = vector.load %arg7[%c0_15, %c0_16] : memref<16x256xf32, #tpu.memory_space<vmem>>, vector<16x256xf32>
      tpu.vector_store %arg7[%c0_15, %c0_16], %16 {strides = array<i32>} : memref<16x256xf32, #tpu.memory_space<vmem>>, vector<16x256xf32>,
    } else {
    }
    return
  }
  func.func @transform_0(%arg0: i32, %arg1: i32, %arg2: i32) -> (i32, i32) {
    %c0_i32 = arith.constant 0 : i32
    return %arg0, %arg2 : i32, i32
  }
  func.func @transform_1(%arg0: i32, %arg1: i32, %arg2: i32) -> (i32, i32) {
    %c0_i32 = arith.constant 0 : i32
    return %arg1, %arg2 : i32, i32
  }
  func.func @transform_2(%arg0: i32, %arg1: i32, %arg2: i32) -> (i32, i32) {
    %c0_i32 = arith.constant 0 : i32
    return %arg1, %arg2 : i32, i32
  }
  func.func @transform_3(%arg0: i32, %arg1: i32, %arg2: i32) -> (i32, i32) {
    %c0_i32 = arith.constant 0 : i32
    return %arg1, %arg2 : i32, i32
  }
  func.func @transform_4(%arg0: i32, %arg1: i32, %arg2: i32) -> (i32, i32) {
    %c0_i32 = arith.constant 0 : i32
    return %arg0, %arg1 : i32, i32
  }
}

</mosaic_0001>

<llo_original>
// kernel: tpu_custom_call.1
$region0: #{tpu_custom_call.1}
  #allocation0 [shape = 'u32[]', space=smem, size = 0x4, offset = 0x4, fixed_abs, tag = 'smem constant byte address 0x4 - core index']
  #allocation1 [shape = 'u32[144,128]{1,0:T(1,128)}', space=vmem, size = 0x12000, scoped, tag = 'internal scratch']
  #allocation2 [shape = 'f32[16,256]{1,0:T(8,128)}', space=vmem, size = 0x4000, scoped, tag = 'scratch operand']
  %s0 = inlined_call_operand.hbm [shape: f32[16,512], index: 0, kind: input, shape index: {}]
  %s1 = inlined_call_operand.hbm [shape: f32[512,512], index: 1, kind: input, shape index: {}]
  %s2 = inlined_call_operand.hbm [shape: f32[512,512], index: 2, kind: input, shape index: {}]
  %s3 = inlined_call_operand.hbm [shape: f32[512,512], index: 3, kind: input, shape index: {}]
  %s4 = inlined_call_operand.hbm [shape: f32[16,512], index: 4, kind: output, shape index: {}]
  %s5 = sld [smem:[#allocation0]]
  $region73: #{tpu_custom_call.1} parent=0
    _
  %s7 = ssub.s32 1, %s5
  %s8 = scalar_select 0, %s7, %s5
  $region1: #{tpu_custom_call.1} parent=0
    #allocation3 [shape = 'u8[32768]{0}', space=vmem, size = 0x8000, scoped, tag = 'input window, operand 0']
    #allocation4 [shape = 's32[2]{0}', space=sflag, size = 0x8, scoped, tag = 'scoped memory for tpu_custom_call.1']
    #allocation5 [shape = 's32[2]{0}', space=sflag, size = 0x8, scoped, tag = 'scoped memory for tpu_custom_call.1']
    #allocation6 [shape = 'u8[524288]{0}', space=vmem, size = 0x80000, scoped, tag = 'input window, operand 1']
    #allocation7 [shape = 's32[2]{0}', space=sflag, size = 0x8, scoped, tag = 'scoped memory for tpu_custom_call.1']
    #allocation8 [shape = 'u8[524288]{0}', space=vmem, size = 0x80000, scoped, tag = 'input window, operand 2']
    #allocation9 [shape = 'u8[524288]{0}', space=vmem, size = 0x80000, scoped, tag = 'input window, operand 3']
    #allocation10 [shape = 's32[2]{0}', space=sflag, size = 0x8, scoped, tag = 'scoped memory for tpu_custom_call.1']
    #allocation11 [shape = 'u8[32768]{0}', space=vmem, size = 0x8000, scoped, tag = 'output window, operand 0']
    %9 = vsyncpa [#allocation4], 0
    %s10 = scalar_lea.sflag [#allocation4], 1
    %11 = vsyncpa %s10, 0
    %12 = vsyncpa [#allocation7], 0
    %s13 = scalar_lea.sflag [#allocation7], 1
    %14 = vsyncpa %s13, 0
    %15 = vsyncpa [#allocation10], 0
    %s16 = scalar_lea.sflag [#allocation10], 1
    %17 = vsyncpa %s16, 0
    %18 = vsyncpa [#allocation5], 0
    %s19 = scalar_lea.sflag [#allocation5], 1
    %20 = vsyncpa %s19, 0
    loop: start=0, step=1, limit=6
    $region2: #{tpu_custom_call.1} parent=1 // loop_pre_header
      _
    $region3: #{tpu_custom_call.1} parent=1 // loop_header
      %s22 = sphi 0, %s26
      %p23 = scmp.ge.s32.totalorder %s22, 6
      %s29 = sphi 0, %s48
      %s30 = sphi 0, %s44
      %s31 = sphi 0, %s40
      %s32 = sphi 0, %s29
      %s33 = sphi 0, %s30
      %s34 = sphi 0, %s31
      %s35 = sphi 0, %s32
      %s36 = sphi 0, %s33
      %s37 = sphi 0, %s34
      %s53 = sphi 0, %s55
      %s56 = sphi 0, %s53
      %s57 = sphi 0, %s56
      %s73 = sphi 0, %s57
      %s81 = sphi 0, %s83
      %s84 = sphi 0, %s81
      %s85 = sphi 0, %s84
      %s101 = sphi 0, %s85
      %s109 = sphi 0, %s111
      %s112 = sphi 0, %s109
      %s113 = sphi 0, %s112
      %s129 = sphi 0, %s113
      %s137 = sphi 0, %s139
      %s140 = sphi 0, %s137
      %s141 = sphi 0, %s140
      %s157 = sphi 0, %s141
      %s165 = sphi 0, %s167
      %s168 = sphi 0, %s165
      %s169 = sphi 0, %s168
      %s185 = sphi 0, %s169
    $region4: #{tpu_custom_call.1} parent=1 // loop_header_branch
      %25 = sbr.rel (%p23) target = $region8
    $region5: #{tpu_custom_call.1} parent=1 // loop_body
      %s27 = ssub.s32 %s22, 1
      %s28 = ssub.s32 %s22, 2
      %s38 = sadd.s32 1, %s31
      %p39 = scmp.ge.s32.totalorder %s38, 2
      %s40 = scalar_select %p39, 0, %s38
      %s41 = sadd.s32 1, %s30
      %s42 = scalar_select %p39, %s41, %s30
      %p43 = scmp.ge.s32.totalorder %s42, 2
      %s44 = scalar_select %p43, 0, %s42
      %s45 = sadd.s32 1, %s29
      %s46 = scalar_select %p43, %s45, %s29
      %p47 = scmp.ge.s32.totalorder %s46, 1
      %s48 = scalar_select %p47, 0, %s46
      %s49 = ssub.s32 %s29, %s48
      %s50 = ssub.s32 %s31, %s40
      %s51 = sor.u32 %s49, %s50
      %p52 = scmp.eq.s32.totalorder %s51, 0
      %s54 = sadd.s32 %s53, 1
      %s55 = scalar_select %p52, %s53, %s54
      %p58 = pneg %p52
      %p59 = scmp.eq.s32.totalorder %s22, 3
      %p60 = por %p58, %p59
      %p61 = scmp.ne.s32.totalorder %s53, %s56
      %p62 = scmp.eq.s32.totalorder %s22, 0
      %p63 = por %p61, %p62
      %p64 = scmp.ne.s32.totalorder %s53, %s56
      %p65 = scmp.eq.s32.totalorder %s27, 3
      %p66 = por %p64, %p65
      %p67 = scmp.ne.s32.totalorder %s56, %s57
      %p68 = scmp.eq.s32.totalorder %s27, 0
      %p69 = por %p67, %p68
      %p70 = scmp.ne.s32.totalorder %s56, %s57
      %p71 = scmp.eq.s32.totalorder %s28, 3
      %p72 = por %p70, %p71
      %p74 = scmp.ne.s32.totalorder %s57, %s73
      %p75 = scmp.eq.s32.totalorder %s28, 0
      %p76 = por %p74, %p75
      %s77 = ssub.s32 %s30, %s44
      %s78 = ssub.s32 %s31, %s40
      %s79 = sor.u32 %s77, %s78
      %p80 = scmp.eq.s32.totalorder %s79, 0
      %s82 = sadd.s32 %s81, 1
      %s83 = scalar_select %p80, %s81, %s82
      %p86 = pneg %p80
      %p87 = scmp.eq.s32.totalorder %s22, 3
      %p88 = por %p86, %p87
      %p89 = scmp.ne.s32.totalorder %s81, %s84
      %p90 = scmp.eq.s32.totalorder %s22, 0
      %p91 = por %p89, %p90
      %p92 = scmp.ne.s32.totalorder %s81, %s84
      %p93 = scmp.eq.s32.totalorder %s27, 3
      %p94 = por %p92, %p93
      %p95 = scmp.ne.s32.totalorder %s84, %s85
      %p96 = scmp.eq.s32.totalorder %s27, 0
      %p97 = por %p95, %p96
      %p98 = scmp.ne.s32.totalorder %s84, %s85
      %p99 = scmp.eq.s32.totalorder %s28, 3
      %p100 = por %p98, %p99
      %p102 = scmp.ne.s32.totalorder %s85, %s101
      %p103 = scmp.eq.s32.totalorder %s28, 0
      %p104 = por %p102, %p103
      %s105 = ssub.s32 %s30, %s44
      %s106 = ssub.s32 %s31, %s40
      %s107 = sor.u32 %s105, %s106
      %p108 = scmp.eq.s32.totalorder %s107, 0
      %s110 = sadd.s32 %s109, 1
      %s111 = scalar_select %p108, %s109, %s110
      %p114 = pneg %p108
      %p115 = scmp.eq.s32.totalorder %s22, 3
      %p116 = por %p114, %p115
      %p117 = scmp.ne.s32.totalorder %s109, %s112
      %p118 = scmp.eq.s32.totalorder %s22, 0
      %p119 = por %p117, %p118
      %p120 = scmp.ne.s32.totalorder %s109, %s112
      %p121 = scmp.eq.s32.totalorder %s27, 3
      %p122 = por %p120, %p121
      %p123 = scmp.ne.s32.totalorder %s112, %s113
      %p124 = scmp.eq.s32.totalorder %s27, 0
      %p125 = por %p123, %p124
      %p126 = scmp.ne.s32.totalorder %s112, %s113
      %p127 = scmp.eq.s32.totalorder %s28, 3
      %p128 = por %p126, %p127
      %p130 = scmp.ne.s32.totalorder %s113, %s129
      %p131 = scmp.eq.s32.totalorder %s28, 0
      %p132 = por %p130, %p131
      %s133 = ssub.s32 %s30, %s44
      %s134 = ssub.s32 %s31, %s40
      %s135 = sor.u32 %s133, %s134
      %p136 = scmp.eq.s32.totalorder %s135, 0
      %s138 = sadd.s32 %s137, 1
      %s139 = scalar_select %p136, %s137, %s138
      %p142 = pneg %p136
      %p143 = scmp.eq.s32.totalorder %s22, 3
      %p144 = por %p142, %p143
      %p145 = scmp.ne.s32.totalorder %s137, %s140
      %p146 = scmp.eq.s32.totalorder %s22, 0
      %p147 = por %p145, %p146
      %p148 = scmp.ne.s32.totalorder %s137, %s140
      %p149 = scmp.eq.s32.totalorder %s27, 3
      %p150 = por %p148, %p149
      %p151 = scmp.ne.s32.totalorder %s140, %s141
      %p152 = scmp.eq.s32.totalorder %s27, 0
      %p153 = por %p151, %p152
      %p154 = scmp.ne.s32.totalorder %s140, %s141
      %p155 = scmp.eq.s32.totalorder %s28, 3
      %p156 = por %p154, %p155
      %p158 = scmp.ne.s32.totalorder %s141, %s157
      %p159 = scmp.eq.s32.totalorder %s28, 0
      %p160 = por %p158, %p159
      %s161 = ssub.s32 %s29, %s48
      %s162 = ssub.s32 %s30, %s44
      %s163 = sor.u32 %s161, %s162
      %p164 = scmp.eq.s32.totalorder %s163, 0
      %s166 = sadd.s32 %s165, 1
      %s167 = scalar_select %p164, %s165, %s166
      %p170 = pneg %p164
      %p171 = scmp.eq.s32.totalorder %s22, 3
      %p172 = por %p170, %p171
      %p173 = scmp.ne.s32.totalorder %s165, %s168
      %p174 = scmp.eq.s32.totalorder %s22, 0
      %p175 = por %p173, %p174
      %p176 = scmp.ne.s32.totalorder %s165, %s168
      %p177 = scmp.eq.s32.totalorder %s27, 3
      %p178 = por %p176, %p177
      %p179 = scmp.ne.s32.totalorder %s168, %s169
      %p180 = scmp.eq.s32.totalorder %s27, 0
      %p181 = por %p179, %p180
      %p182 = scmp.ne.s32.totalorder %s168, %s169
      %p183 = scmp.eq.s32.totalorder %s28, 3
      %p184 = por %p182, %p183
      %p186 = scmp.ne.s32.totalorder %s169, %s185
      %p187 = scmp.eq.s32.totalorder %s28, 0
      %p188 = por %p186, %p187
      %p189 = scmp.le.s32.totalorder 1, %s22
      %p190 = scmp.lt.s32.totalorder %s22, 5
      %p191 = pnand %p189, %p190
      %p192 = pneg %p191
      // Predicated region
      $region9: #{tpu_custom_call.1} parent=5 // pred_check
        _
      $region10: #{tpu_custom_call.1} parent=5 // pred_check_branch
        %194 = sbr.rel (%p191) target = $region12
      $region11: #{tpu_custom_call.1} parent=5 // pred_region
        %s195 = ssub.s32 %s22, 1
      $region12: #{tpu_custom_call.1} parent=5 // pred_fallthru
        _
      %p196 = scmp.lt.s32.totalorder %s22, 4
      // Predicated region
      $region13: #{tpu_custom_call.1} parent=5 // pred_check
        %p197 = pneg %p196
      $region14: #{tpu_custom_call.1} parent=5 // pred_check_branch
        %199 = sbr.rel (%p197) target = $region16
      $region15: #{tpu_custom_call.1} parent=5 // pred_region
        // Predicated region
        $region17: #{tpu_custom_call.1} parent=15 // pred_check
          %p200 = pneg %p63
        $region18: #{tpu_custom_call.1} parent=15 // pred_check_branch
          %202 = sbr.rel (%p200) target = $region20
        $region19: #{tpu_custom_call.1} parent=15 // pred_region
          %s203 = sand.u32 %s53, 1
          %s204 = scalar_lea.sflag [#allocation4], %s203
          %s205 = sand.u32 %s53, 1
          %s206 = smul.addr %s205, 32
          %s207 = scalar_lea.vmem [#allocation3], %s206
          %s208 = smul.u32 2, %s29
          %s209 = smul.u32 2, %s31
          %s211 = ssub.s32 512, 512
          %212 = vsyncadd %s204, %s211
          %s213 = smul.addr %s208, 4
          %s214 = sadd.s32 %s209, %s213
          %s215 = smul.addr %s214, 128
          %s216 = scalar_lea.hbm %s0, %s215
          %s217 = sshll.u32 %s207, 4
          %s218 = int_to_ptr.vmem [resolvable:$true] %s217
          %223 = dma.hbm_to_vmem [thread:$0]  %s216, 512, %s218, %s204, 512, 256, 16
        $region20: #{tpu_custom_call.1} parent=15 // pred_fallthru
          _
        // Predicated region
        $region21: #{tpu_custom_call.1} parent=15 // pred_check
          %p224 = pneg %p91
        $region22: #{tpu_custom_call.1} parent=15 // pred_check_branch
          %226 = sbr.rel (%p224) target = $region24
        $region23: #{tpu_custom_call.1} parent=15 // pred_region
          %s227 = sand.u32 %s22, 1
          %s228 = scalar_lea.sflag [#allocation7], %s227
          %s229 = sand.u32 %s81, 1
          %s230 = smul.addr %s229, 512
          %s231 = scalar_lea.vmem [#allocation6], %s230
          %s232 = smul.u32 32, %s30
          %s233 = smul.u32 2, %s31
          %s235 = ssub.s32 8192, 8192
          %236 = vsyncadd %s228, %s235
          %s237 = smul.addr %s232, 4
          %s238 = sadd.s32 %s233, %s237
          %s239 = smul.addr %s238, 128
          %s240 = scalar_lea.hbm %s1, %s239
          %s241 = sshll.u32 %s231, 4
          %s242 = int_to_ptr.vmem [resolvable:$true] %s241
          %247 = dma.hbm_to_vmem [thread:$0]  %s240, 8192, %s242, %s228, 512, 256, 16
        $region24: #{tpu_custom_call.1} parent=15 // pred_fallthru
          _
        // Predicated region
        $region25: #{tpu_custom_call.1} parent=15 // pred_check
          %p248 = pneg %p119
        $region26: #{tpu_custom_call.1} parent=15 // pred_check_branch
          %250 = sbr.rel (%p248) target = $region28
        $region27: #{tpu_custom_call.1} parent=15 // pred_region
          %s251 = sand.u32 %s22, 1
          %s252 = scalar_lea.sflag [#allocation7], %s251
          %s253 = sand.u32 %s109, 1
          %s254 = smul.addr %s253, 512
          %s255 = scalar_lea.vmem [#allocation8], %s254
          %s256 = smul.u32 32, %s30
          %s257 = smul.u32 2, %s31
          %s259 = ssub.s32 8192, 8192
          %260 = vsyncadd %s252, %s259
          %s261 = smul.addr %s256, 4
          %s262 = sadd.s32 %s257, %s261
          %s263 = smul.addr %s262, 128
          %s264 = scalar_lea.hbm %s2, %s263
          %s265 = sshll.u32 %s255, 4
          %s266 = int_to_ptr.vmem [resolvable:$true] %s265
          %271 = dma.hbm_to_vmem [thread:$0]  %s264, 8192, %s266, %s252, 512, 256, 16
        $region28: #{tpu_custom_call.1} parent=15 // pred_fallthru
          _
        // Predicated region
        $region29: #{tpu_custom_call.1} parent=15 // pred_check
          %p272 = pneg %p147
        $region30: #{tpu_custom_call.1} parent=15 // pred_check_branch
          %274 = sbr.rel (%p272) target = $region32
        $region31: #{tpu_custom_call.1} parent=15 // pred_region
          %s275 = sand.u32 %s137, 1
          %s276 = scalar_lea.sflag [#allocation10], %s275
          %s277 = sand.u32 %s137, 1
          %s278 = smul.addr %s277, 512
          %s279 = scalar_lea.vmem [#allocation9], %s278
          %s280 = smul.u32 32, %s30
          %s281 = smul.u32 2, %s31
          %s283 = ssub.s32 8192, 8192
          %284 = vsyncadd %s276, %s283
          %s285 = smul.addr %s280, 4
          %s286 = sadd.s32 %s281, %s285
          %s287 = smul.addr %s286, 128
          %s288 = scalar_lea.hbm %s3, %s287
          %s289 = sshll.u32 %s279, 4
          %s290 = int_to_ptr.vmem [resolvable:$true] %s289
          %295 = dma.hbm_to_vmem [thread:$0]  %s288, 8192, %s290, %s276, 512, 256, 16
        $region32: #{tpu_custom_call.1} parent=15 // pred_fallthru
          _
      $region16: #{tpu_custom_call.1} parent=5 // pred_fallthru
        _
      %p296 = scmp.le.s32.totalorder 1, %s22
      %p297 = scmp.lt.s32.totalorder %s22, 5
      %p298 = pnand %p296, %p297
      %p299 = pneg %p298
      // Predicated region
      $region33: #{tpu_custom_call.1} parent=5 // pred_check
        _
      $region34: #{tpu_custom_call.1} parent=5 // pred_check_branch
        %301 = sbr.rel (%p298) target = $region36
      $region35: #{tpu_custom_call.1} parent=5 // pred_region
        %s302 = ssub.s32 %s22, 1
        %s303 = sand.u32 %s56, 1
        %s304 = scalar_lea.sflag [#allocation4], %s303
        %s305 = sand.u32 %s56, 1
        %s306 = smul.addr %s305, 32
        %s307 = scalar_lea.vmem [#allocation3], %s306
        // Predicated region
        $region37: #{tpu_custom_call.1} parent=35 // pred_check
          %p308 = pneg %p69
        $region38: #{tpu_custom_call.1} parent=35 // pred_check_branch
          %310 = sbr.rel (%p308) target = $region40
        $region39: #{tpu_custom_call.1} parent=35 // pred_region
          %311 = dma.done %s304, 512
        $region40: #{tpu_custom_call.1} parent=35 // pred_fallthru
          _
        %s312 = sand.u32 %s27, 1
        %s313 = scalar_lea.sflag [#allocation7], %s312
        %s314 = sand.u32 %s84, 1
        %s315 = smul.addr %s314, 512
        %s316 = scalar_lea.vmem [#allocation6], %s315
        // Predicated region
        $region41: #{tpu_custom_call.1} parent=35 // pred_check
          %p317 = pneg %p97
        $region42: #{tpu_custom_call.1} parent=35 // pred_check_branch
          %319 = sbr.rel (%p317) target = $region44
        $region43: #{tpu_custom_call.1} parent=35 // pred_region
          %320 = dma.done %s313, 8192
        $region44: #{tpu_custom_call.1} parent=35 // pred_fallthru
          _
        %s321 = sand.u32 %s27, 1
        %s322 = scalar_lea.sflag [#allocation7], %s321
        %s323 = sand.u32 %s112, 1
        %s324 = smul.addr %s323, 512
        %s325 = scalar_lea.vmem [#allocation8], %s324
        // Predicated region
        $region45: #{tpu_custom_call.1} parent=35 // pred_check
          %p326 = pneg %p125
        $region46: #{tpu_custom_call.1} parent=35 // pred_check_branch
          %328 = sbr.rel (%p326) target = $region48
        $region47: #{tpu_custom_call.1} parent=35 // pred_region
          %329 = dma.done %s322, 8192
        $region48: #{tpu_custom_call.1} parent=35 // pred_fallthru
          _
        %s330 = sand.u32 %s140, 1
        %s331 = scalar_lea.sflag [#allocation10], %s330
        %s332 = sand.u32 %s140, 1
        %s333 = smul.addr %s332, 512
        %s334 = scalar_lea.vmem [#allocation9], %s333
        // Predicated region
        $region49: #{tpu_custom_call.1} parent=35 // pred_check
          %p335 = pneg %p153
        $region50: #{tpu_custom_call.1} parent=35 // pred_check_branch
          %337 = sbr.rel (%p335) target = $region52
        $region51: #{tpu_custom_call.1} parent=35 // pred_region
          %338 = dma.done %s331, 8192
        $region52: #{tpu_custom_call.1} parent=35 // pred_fallthru
          _
        %s339 = sand.u32 %s56, 1
        %s340 = scalar_lea.sflag [#allocation4], %s339
        %s341 = sand.u32 %s56, 1
        %s342 = smul.addr %s341, 32
        %s343 = scalar_lea.vmem [#allocation3], %s342
        %p344 = pneg %p69
        %p345 = pneg %p66
        %s346 = sand.u32 %s27, 1
        %s347 = scalar_lea.sflag [#allocation7], %s346
        %s348 = sand.u32 %s84, 1
        %s349 = smul.addr %s348, 512
        %s350 = scalar_lea.vmem [#allocation6], %s349
        %p351 = pneg %p97
        %p352 = pneg %p94
        %s353 = sand.u32 %s27, 1
        %s354 = scalar_lea.sflag [#allocation7], %s353
        %s355 = sand.u32 %s112, 1
        %s356 = smul.addr %s355, 512
        %s357 = scalar_lea.vmem [#allocation8], %s356
        %p358 = pneg %p125
        %p359 = pneg %p122
        %s360 = sand.u32 %s140, 1
        %s361 = scalar_lea.sflag [#allocation10], %s360
        %s362 = sand.u32 %s140, 1
        %s363 = smul.addr %s362, 512
        %s364 = scalar_lea.vmem [#allocation9], %s363
        %p365 = pneg %p153
        %p366 = pneg %p150
        %p367 = pneg %p181
        %p368 = pneg %p178
        %s369 = sand.u32 %s168, 1
        %s370 = scalar_lea.sflag [#allocation5], %s369
        %s371 = sand.u32 %s168, 1
        %s372 = smul.addr %s371, 32
        %s373 = scalar_lea.vmem [#allocation11], %s372
        %s374 = smul.u32 2, %s32
        %s375 = smul.u32 2, %s34
        %s376 = smul.u32 32, %s33
        %s377 = smul.u32 2, %s34
        %s378 = smul.u32 32, %s33
        %s379 = smul.u32 2, %s34
        %s380 = smul.u32 32, %s33
        %s381 = smul.u32 2, %s34
        %s382 = smul.u32 2, %s32
        %s383 = smul.u32 2, %s33
        %p384 = scmp.eq.s32.totalorder %s34, 0
        // Predicated region
        $region53: #{tpu_custom_call.1} parent=35 // pred_check
          %p385 = pneg %p384
        $region54: #{tpu_custom_call.1} parent=35 // pred_check_branch
          %387 = sbr.rel (%p385) target = $region56
        $region55: #{tpu_custom_call.1} parent=35 // pred_region
          %388 = vst [vmem:[#allocation2] sm:$0xff] 0.0
          %389 = vst [vmem:[#allocation2 + $0x8] sm:$0xff] 0.0
          %390 = vst [vmem:[#allocation2 + $0x10] sm:$0xff] 0.0
          %391 = vst [vmem:[#allocation2 + $0x18] sm:$0xff] 0.0
        $region56: #{tpu_custom_call.1} parent=35 // pred_fallthru
          _
        %v392 = vld [vmem:[%s316] sm:$0xff]
        %v393 = vld [vmem:[%s316 + $0x8] sm:$0xff]
        %v394 = vld [vmem:[%s316 + $0x10] sm:$0xff]
        %v395 = vld [vmem:[%s316 + $0x18] sm:$0xff]
        %v396 = vld [vmem:[%s316 + $0x20] sm:$0xff]
        %v397 = vld [vmem:[%s316 + $0x28] sm:$0xff]
        %v398 = vld [vmem:[%s316 + $0x30] sm:$0xff]
        %v399 = vld [vmem:[%s316 + $0x38] sm:$0xff]
        %v400 = vld [vmem:[%s316 + $0x40] sm:$0xff]
        %v401 = vld [vmem:[%s316 + $0x48] sm:$0xff]
        %v402 = vld [vmem:[%s316 + $0x50] sm:$0xff]
        %v403 = vld [vmem:[%s316 + $0x58] sm:$0xff]
        %v404 = vld [vmem:[%s316 + $0x60] sm:$0xff]
        %v405 = vld [vmem:[%s316 + $0x68] sm:$0xff]
        %v406 = vld [vmem:[%s316 + $0x70] sm:$0xff]
        %v407 = vld [vmem:[%s316 + $0x78] sm:$0xff]
        %v408 = vld [vmem:[%s316 + $0x80] sm:$0xff]
        %v409 = vld [vmem:[%s316 + $0x88] sm:$0xff]
        %v410 = vld [vmem:[%s316 + $0x90] sm:$0xff]
        %v411 = vld [vmem:[%s316 + $0x98] sm:$0xff]
        %v412 = vld [vmem:[%s316 + $0xa0] sm:$0xff]
        %v413 = vld [vmem:[%s316 + $0xa8] sm:$0xff]
        %v414 = vld [vmem:[%s316 + $0xb0] sm:$0xff]
        %v415 = vld [vmem:[%s316 + $0xb8] sm:$0xff]
        %v416 = vld [vmem:[%s316 + $0xc0] sm:$0xff]
        %v417 = vld [vmem:[%s316 + $0xc8] sm:$0xff]
        %v418 = vld [vmem:[%s316 + $0xd0] sm:$0xff]
        %v419 = vld [vmem:[%s316 + $0xd8] sm:$0xff]
        %v420 = vld [vmem:[%s316 + $0xe0] sm:$0xff]
        %v421 = vld [vmem:[%s316 + $0xe8] sm:$0xff]
        %v422 = vld [vmem:[%s316 + $0xf0] sm:$0xff]
        %v423 = vld [vmem:[%s316 + $0xf8] sm:$0xff]
        %v424 = vld [vmem:[%s316 + $0x100] sm:$0xff]
        %v425 = vld [vmem:[%s316 + $0x108] sm:$0xff]
        %v426 = vld [vmem:[%s316 + $0x110] sm:$0xff]
        %v427 = vld [vmem:[%s316 + $0x118] sm:$0xff]
        %v428 = vld [vmem:[%s316 + $0x120] sm:$0xff]
        %v429 = vld [vmem:[%s316 + $0x128] sm:$0xff]
        %v430 = vld [vmem:[%s316 + $0x130] sm:$0xff]
        %v431 = vld [vmem:[%s316 + $0x138] sm:$0xff]
        %v432 = vld [vmem:[%s316 + $0x140] sm:$0xff]
        %v433 = vld [vmem:[%s316 + $0x148] sm:$0xff]
        %v434 = vld [vmem:[%s316 + $0x150] sm:$0xff]
        %v435 = vld [vmem:[%s316 + $0x158] sm:$0xff]
        %v436 = vld [vmem:[%s316 + $0x160] sm:$0xff]
        %v437 = vld [vmem:[%s316 + $0x168] sm:$0xff]
        %v438 = vld [vmem:[%s316 + $0x170] sm:$0xff]
        %v439 = vld [vmem:[%s316 + $0x178] sm:$0xff]
        %v440 = vld [vmem:[%s316 + $0x180] sm:$0xff]
        %v441 = vld [vmem:[%s316 + $0x188] sm:$0xff]
        %v442 = vld [vmem:[%s316 + $0x190] sm:$0xff]
        %v443 = vld [vmem:[%s316 + $0x198] sm:$0xff]
        %v444 = vld [vmem:[%s316 + $0x1a0] sm:$0xff]
        %v445 = vld [vmem:[%s316 + $0x1a8] sm:$0xff]
        %v446 = vld [vmem:[%s316 + $0x1b0] sm:$0xff]
        %v447 = vld [vmem:[%s316 + $0x1b8] sm:$0xff]
        %v448 = vld [vmem:[%s316 + $0x1c0] sm:$0xff]
        %v449 = vld [vmem:[%s316 + $0x1c8] sm:$0xff]
        %v450 = vld [vmem:[%s316 + $0x1d0] sm:$0xff]
        %v451 = vld [vmem:[%s316 + $0x1d8] sm:$0xff]
        %v452 = vld [vmem:[%s316 + $0x1e0] sm:$0xff]
        %v453 = vld [vmem:[%s316 + $0x1e8] sm:$0xff]
        %v454 = vld [vmem:[%s316 + $0x1f0] sm:$0xff]
        %v455 = vld [vmem:[%s316 + $0x1f8] sm:$0xff]
        %v456 = vld [vmem:[%s325] sm:$0xff]
        %v457 = vld [vmem:[%s325 + $0x8] sm:$0xff]
        %v458 = vld [vmem:[%s325 + $0x10] sm:$0xff]
        %v459 = vld [vmem:[%s325 + $0x18] sm:$0xff]
        %v460 = vld [vmem:[%s325 + $0x20] sm:$0xff]
        %v461 = vld [vmem:[%s325 + $0x28] sm:$0xff]
        %v462 = vld [vmem:[%s325 + $0x30] sm:$0xff]
        %v463 = vld [vmem:[%s325 + $0x38] sm:$0xff]
        %v464 = vld [vmem:[%s325 + $0x40] sm:$0xff]
        %v465 = vld [vmem:[%s325 + $0x48] sm:$0xff]
        %v466 = vld [vmem:[%s325 + $0x50] sm:$0xff]
        %v467 = vld [vmem:[%s325 + $0x58] sm:$0xff]
        %v468 = vld [vmem:[%s325 + $0x60] sm:$0xff]
        %v469 = vld [vmem:[%s325 + $0x68] sm:$0xff]
        %v470 = vld [vmem:[%s325 + $0x70] sm:$0xff]
        %v471 = vld [vmem:[%s325 + $0x78] sm:$0xff]
        %v472 = vld [vmem:[%s325 + $0x80] sm:$0xff]
        %v473 = vld [vmem:[%s325 + $0x88] sm:$0xff]
        %v474 = vld [vmem:[%s325 + $0x90] sm:$0xff]
        %v475 = vld [vmem:[%s325 + $0x98] sm:$0xff]
        %v476 = vld [vmem:[%s325 + $0xa0] sm:$0xff]
        %v477 = vld [vmem:[%s325 + $0xa8] sm:$0xff]
        %v478 = vld [vmem:[%s325 + $0xb0] sm:$0xff]
        %v479 = vld [vmem:[%s325 + $0xb8] sm:$0xff]
        %v480 = vld [vmem:[%s325 + $0xc0] sm:$0xff]
        %v481 = vld [vmem:[%s325 + $0xc8] sm:$0xff]
        %v482 = vld [vmem:[%s325 + $0xd0] sm:$0xff]
        %v483 = vld [vmem:[%s325 + $0xd8] sm:$0xff]
        %v484 = vld [vmem:[%s325 + $0xe0] sm:$0xff]
        %v485 = vld [vmem:[%s325 + $0xe8] sm:$0xff]
        %v486 = vld [vmem:[%s325 + $0xf0] sm:$0xff]
        %v487 = vld [vmem:[%s325 + $0xf8] sm:$0xff]
        %v488 = vld [vmem:[%s325 + $0x100] sm:$0xff]
        %v489 = vld [vmem:[%s325 + $0x108] sm:$0xff]
        %v490 = vld [vmem:[%s325 + $0x110] sm:$0xff]
        %v491 = vld [vmem:[%s325 + $0x118] sm:$0xff]
        %v492 = vld [vmem:[%s325 + $0x120] sm:$0xff]
        %v493 = vld [vmem:[%s325 + $0x128] sm:$0xff]
        %v494 = vld [vmem:[%s325 + $0x130] sm:$0xff]
        %v495 = vld [vmem:[%s325 + $0x138] sm:$0xff]
        %v496 = vld [vmem:[%s325 + $0x140] sm:$0xff]
        %v497 = vld [vmem:[%s325 + $0x148] sm:$0xff]
        %v498 = vld [vmem:[%s325 + $0x150] sm:$0xff]
        %v499 = vld [vmem:[%s325 + $0x158] sm:$0xff]
        %v500 = vld [vmem:[%s325 + $0x160] sm:$0xff]
        %v501 = vld [vmem:[%s325 + $0x168] sm:$0xff]
        %v502 = vld [vmem:[%s325 + $0x170] sm:$0xff]
        %v503 = vld [vmem:[%s325 + $0x178] sm:$0xff]
        %v504 = vld [vmem:[%s325 + $0x180] sm:$0xff]
        %v505 = vld [vmem:[%s325 + $0x188] sm:$0xff]
        %v506 = vld [vmem:[%s325 + $0x190] sm:$0xff]
        %v507 = vld [vmem:[%s325 + $0x198] sm:$0xff]
        %v508 = vld [vmem:[%s325 + $0x1a0] sm:$0xff]
        %v509 = vld [vmem:[%s325 + $0x1a8] sm:$0xff]
        %v510 = vld [vmem:[%s325 + $0x1b0] sm:$0xff]
        %v511 = vld [vmem:[%s325 + $0x1b8] sm:$0xff]
        %v512 = vld [vmem:[%s325 + $0x1c0] sm:$0xff]
        %v513 = vld [vmem:[%s325 + $0x1c8] sm:$0xff]
        %v514 = vld [vmem:[%s325 + $0x1d0] sm:$0xff]
        %v515 = vld [vmem:[%s325 + $0x1d8] sm:$0xff]
        %v516 = vld [vmem:[%s325 + $0x1e0] sm:$0xff]
        %v517 = vld [vmem:[%s325 + $0x1e8] sm:$0xff]
        %v518 = vld [vmem:[%s325 + $0x1f0] sm:$0xff]
        %v519 = vld [vmem:[%s325 + $0x1f8] sm:$0xff]
        %v520 = vld [vmem:[%s334] sm:$0xff]
        %v521 = vld [vmem:[%s334 + $0x8] sm:$0xff]
        %v522 = vld [vmem:[%s334 + $0x10] sm:$0xff]
        %v523 = vld [vmem:[%s334 + $0x18] sm:$0xff]
        %v524 = vld [vmem:[%s334 + $0x20] sm:$0xff]
        %v525 = vld [vmem:[%s334 + $0x28] sm:$0xff]
        %v526 = vld [vmem:[%s334 + $0x30] sm:$0xff]
        %v527 = vld [vmem:[%s334 + $0x38] sm:$0xff]
        %v528 = vld [vmem:[%s334 + $0x40] sm:$0xff]
        %v529 = vld [vmem:[%s334 + $0x48] sm:$0xff]
        %v530 = vld [vmem:[%s334 + $0x50] sm:$0xff]
        %v531 = vld [vmem:[%s334 + $0x58] sm:$0xff]
        %v532 = vld [vmem:[%s334 + $0x60] sm:$0xff]
        %v533 = vld [vmem:[%s334 + $0x68] sm:$0xff]
        %v534 = vld [vmem:[%s334 + $0x70] sm:$0xff]
        %v535 = vld [vmem:[%s334 + $0x78] sm:$0xff]
        %v536 = vld [vmem:[%s334 + $0x80] sm:$0xff]
        %v537 = vld [vmem:[%s334 + $0x88] sm:$0xff]
        %v538 = vld [vmem:[%s334 + $0x90] sm:$0xff]
        %v539 = vld [vmem:[%s334 + $0x98] sm:$0xff]
        %v540 = vld [vmem:[%s334 + $0xa0] sm:$0xff]
        %v541 = vld [vmem:[%s334 + $0xa8] sm:$0xff]
        %v542 = vld [vmem:[%s334 + $0xb0] sm:$0xff]
        %v543 = vld [vmem:[%s334 + $0xb8] sm:$0xff]
        %v544 = vld [vmem:[%s334 + $0xc0] sm:$0xff]
        %v545 = vld [vmem:[%s334 + $0xc8] sm:$0xff]
        %v546 = vld [vmem:[%s334 + $0xd0] sm:$0xff]
        %v547 = vld [vmem:[%s334 + $0xd8] sm:$0xff]
        %v548 = vld [vmem:[%s334 + $0xe0] sm:$0xff]
        %v549 = vld [vmem:[%s334 + $0xe8] sm:$0xff]
        %v550 = vld [vmem:[%s334 + $0xf0] sm:$0xff]
        %v551 = vld [vmem:[%s334 + $0xf8] sm:$0xff]
        %v552 = vld [vmem:[%s334 + $0x100] sm:$0xff]
        %v553 = vld [vmem:[%s334 + $0x108] sm:$0xff]
        %v554 = vld [vmem:[%s334 + $0x110] sm:$0xff]
        %v555 = vld [vmem:[%s334 + $0x118] sm:$0xff]
        %v556 = vld [vmem:[%s334 + $0x120] sm:$0xff]
        %v557 = vld [vmem:[%s334 + $0x128] sm:$0xff]
        %v558 = vld [vmem:[%s334 + $0x130] sm:$0xff]
        %v559 = vld [vmem:[%s334 + $0x138] sm:$0xff]
        %v560 = vld [vmem:[%s334 + $0x140] sm:$0xff]
        %v561 = vld [vmem:[%s334 + $0x148] sm:$0xff]
        %v562 = vld [vmem:[%s334 + $0x150] sm:$0xff]
        %v563 = vld [vmem:[%s334 + $0x158] sm:$0xff]
        %v564 = vld [vmem:[%s334 + $0x160] sm:$0xff]
        %v565 = vld [vmem:[%s334 + $0x168] sm:$0xff]
        %v566 = vld [vmem:[%s334 + $0x170] sm:$0xff]
        %v567 = vld [vmem:[%s334 + $0x178] sm:$0xff]
        %v568 = vld [vmem:[%s334 + $0x180] sm:$0xff]
        %v569 = vld [vmem:[%s334 + $0x188] sm:$0xff]
        %v570 = vld [vmem:[%s334 + $0x190] sm:$0xff]
        %v571 = vld [vmem:[%s334 + $0x198] sm:$0xff]
        %v572 = vld [vmem:[%s334 + $0x1a0] sm:$0xff]
        %v573 = vld [vmem:[%s334 + $0x1a8] sm:$0xff]
        %v574 = vld [vmem:[%s334 + $0x1b0] sm:$0xff]
        %v575 = vld [vmem:[%s334 + $0x1b8] sm:$0xff]
        %v576 = vld [vmem:[%s334 + $0x1c0] sm:$0xff]
        %v577 = vld [vmem:[%s334 + $0x1c8] sm:$0xff]
        %v578 = vld [vmem:[%s334 + $0x1d0] sm:$0xff]
        %v579 = vld [vmem:[%s334 + $0x1d8] sm:$0xff]
        %v580 = vld [vmem:[%s334 + $0x1e0] sm:$0xff]
        %v581 = vld [vmem:[%s334 + $0x1e8] sm:$0xff]
        %v582 = vld [vmem:[%s334 + $0x1f0] sm:$0xff]
        %v583 = vld [vmem:[%s334 + $0x1f8] sm:$0xff]
        %v584 = vmul.f32 %v456, %v520
        %v585 = vmul.f32 %v457, %v521
        %v586 = vmul.f32 %v458, %v522
        %v587 = vmul.f32 %v459, %v523
        %v588 = vmul.f32 %v460, %v524
        %v589 = vmul.f32 %v461, %v525
        %v590 = vmul.f32 %v462, %v526
        %v591 = vmul.f32 %v463, %v527
        %v592 = vmul.f32 %v464, %v528
        %v593 = vmul.f32 %v465, %v529
        %v594 = vmul.f32 %v466, %v530
        %v595 = vmul.f32 %v467, %v531
        %v596 = vmul.f32 %v468, %v532
        %v597 = vmul.f32 %v469, %v533
        %v598 = vmul.f32 %v470, %v534
        %v599 = vmul.f32 %v471, %v535
        %v600 = vmul.f32 %v472, %v536
        %v601 = vmul.f32 %v473, %v537
        %v602 = vmul.f32 %v474, %v538
        %v603 = vmul.f32 %v475, %v539
        %v604 = vmul.f32 %v476, %v540
        %v605 = vmul.f32 %v477, %v541
        %v606 = vmul.f32 %v478, %v542
        %v607 = vmul.f32 %v479, %v543
        %v608 = vmul.f32 %v480, %v544
        %v609 = vmul.f32 %v481, %v545
        %v610 = vmul.f32 %v482, %v546
        %v611 = vmul.f32 %v483, %v547
        %v612 = vmul.f32 %v484, %v548
        %v613 = vmul.f32 %v485, %v549
        %v614 = vmul.f32 %v486, %v550
        %v615 = vmul.f32 %v487, %v551
        %v616 = vmul.f32 %v488, %v552
        %v617 = vmul.f32 %v489, %v553
        %v618 = vmul.f32 %v490, %v554
        %v619 = vmul.f32 %v491, %v555
        %v620 = vmul.f32 %v492, %v556
        %v621 = vmul.f32 %v493, %v557
        %v622 = vmul.f32 %v494, %v558
        %v623 = vmul.f32 %v495, %v559
        %v624 = vmul.f32 %v496, %v560
        %v625 = vmul.f32 %v497, %v561
        %v626 = vmul.f32 %v498, %v562
        %v627 = vmul.f32 %v499, %v563
        %v628 = vmul.f32 %v500, %v564
        %v629 = vmul.f32 %v501, %v565
        %v630 = vmul.f32 %v502, %v566
        %v631 = vmul.f32 %v503, %v567
        %v632 = vmul.f32 %v504, %v568
        %v633 = vmul.f32 %v505, %v569
        %v634 = vmul.f32 %v506, %v570
        %v635 = vmul.f32 %v507, %v571
        %v636 = vmul.f32 %v508, %v572
        %v637 = vmul.f32 %v509, %v573
        %v638 = vmul.f32 %v510, %v574
        %v639 = vmul.f32 %v511, %v575
        %v640 = vmul.f32 %v512, %v576
        %v641 = vmul.f32 %v513, %v577
        %v642 = vmul.f32 %v514, %v578
        %v643 = vmul.f32 %v515, %v579
        %v644 = vmul.f32 %v516, %v580
        %v645 = vmul.f32 %v517, %v581
        %v646 = vmul.f32 %v518, %v582
        %v647 = vmul.f32 %v519, %v583
        %v648 = vadd.f32 %v392, %v584
        %v649 = vadd.f32 %v393, %v585
        %v650 = vadd.f32 %v394, %v586
        %v651 = vadd.f32 %v395, %v587
        %v652 = vadd.f32 %v396, %v588
        %v653 = vadd.f32 %v397, %v589
        %v654 = vadd.f32 %v398, %v590
        %v655 = vadd.f32 %v399, %v591
        %v656 = vadd.f32 %v400, %v592
        %v657 = vadd.f32 %v401, %v593
        %v658 = vadd.f32 %v402, %v594
        %v659 = vadd.f32 %v403, %v595
        %v660 = vadd.f32 %v404, %v596
        %v661 = vadd.f32 %v405, %v597
        %v662 = vadd.f32 %v406, %v598
        %v663 = vadd.f32 %v407, %v599
        %v664 = vadd.f32 %v408, %v600
        %v665 = vadd.f32 %v409, %v601
        %v666 = vadd.f32 %v410, %v602
        %v667 = vadd.f32 %v411, %v603
        %v668 = vadd.f32 %v412, %v604
        %v669 = vadd.f32 %v413, %v605
        %v670 = vadd.f32 %v414, %v606
        %v671 = vadd.f32 %v415, %v607
        %v672 = vadd.f32 %v416, %v608
        %v673 = vadd.f32 %v417, %v609
        %v674 = vadd.f32 %v418, %v610
        %v675 = vadd.f32 %v419, %v611
        %v676 = vadd.f32 %v420, %v612
        %v677 = vadd.f32 %v421, %v613
        %v678 = vadd.f32 %v422, %v614
        %v679 = vadd.f32 %v423, %v615
        %v680 = vadd.f32 %v424, %v616
        %v681 = vadd.f32 %v425, %v617
        %v682 = vadd.f32 %v426, %v618
        %v683 = vadd.f32 %v427, %v619
        %v684 = vadd.f32 %v428, %v620
        %v685 = vadd.f32 %v429, %v621
        %v686 = vadd.f32 %v430, %v622
        %v687 = vadd.f32 %v431, %v623
        %v688 = vadd.f32 %v432, %v624
        %v689 = vadd.f32 %v433, %v625
        %v690 = vadd.f32 %v434, %v626
        %v691 = vadd.f32 %v435, %v627
        %v692 = vadd.f32 %v436, %v628
        %v693 = vadd.f32 %v437, %v629
        %v694 = vadd.f32 %v438, %v630
        %v695 = vadd.f32 %v439, %v631
        %v696 = vadd.f32 %v440, %v632
        %v697 = vadd.f32 %v441, %v633
        %v698 = vadd.f32 %v442, %v634
        %v699 = vadd.f32 %v443, %v635
        %v700 = vadd.f32 %v444, %v636
        %v701 = vadd.f32 %v445, %v637
        %v702 = vadd.f32 %v446, %v638
        %v703 = vadd.f32 %v447, %v639
        %v704 = vadd.f32 %v448, %v640
        %v705 = vadd.f32 %v449, %v641
        %v706 = vadd.f32 %v450, %v642
        %v707 = vadd.f32 %v451, %v643
        %v708 = vadd.f32 %v452, %v644
        %v709 = vadd.f32 %v453, %v645
        %v710 = vadd.f32 %v454, %v646
        %v711 = vadd.f32 %v455, %v647
        %v712 = vld [vmem:[%s307] sm:$0xff]
        %v713 = vld [vmem:[%s307 + $0x8] sm:$0xff]
        %v714 = vld [vmem:[%s307 + $0x10] sm:$0xff]
        %v715 = vld [vmem:[%s307 + $0x18] sm:$0xff]
        %v716 = vld [vmem:[#allocation2] sm:$0xff]
        %v717 = vld [vmem:[#allocation2 + $0x8] sm:$0xff]
        %v718 = vld [vmem:[#allocation2 + $0x10] sm:$0xff]
        %v719 = vld [vmem:[#allocation2 + $0x18] sm:$0xff]
        %720 = vmatprep.subr.mxu0 %v649
        %721 = vmatpush1.xpose.msra.mxu0 %v648
        %722 = vmatprep.subr.mxu0 %v651
        %723 = vmatpush1.xpose.msra.mxu0 %v650
        %724 = vmatprep.subr.mxu0 %v653
        %725 = vmatpush1.xpose.msra.mxu0 %v652
        %726 = vmatprep.subr.mxu0 %v655
        %727 = vmatpush1.xpose.msra.mxu0 %v654
        %728 = vmatprep.subr.mxu0 %v657
        %729 = vmatpush1.xpose.msra.mxu0 %v656
        %730 = vmatprep.subr.mxu0 %v659
        %731 = vmatpush1.xpose.msra.mxu0 %v658
        %732 = vmatprep.subr.mxu0 %v661
        %733 = vmatpush1.xpose.msra.mxu0 %v660
        %734 = vmatprep.subr.mxu0 %v663
        %735 = vmatpush1.xpose.msra.mxu0 %v662
        %736 = vmatprep.subr.mxu0 %v665
        %737 = vmatpush1.xpose.msra.mxu0 %v664
        %738 = vmatprep.subr.mxu0 %v667
        %739 = vmatpush1.xpose.msra.mxu0 %v666
        %740 = vmatprep.subr.mxu0 %v669
        %741 = vmatpush1.xpose.msra.mxu0 %v668
        %742 = vmatprep.subr.mxu0 %v671
        %743 = vmatpush1.xpose.msra.mxu0 %v670
        %744 = vmatprep.subr.mxu0 %v673
        %745 = vmatpush1.xpose.msra.mxu0 %v672
        %746 = vmatprep.subr.mxu0 %v675
        %747 = vmatpush1.xpose.msra.mxu0 %v674
        %748 = vmatprep.subr.mxu0 %v677
        %749 = vmatpush1.xpose.msra.mxu0 %v676
        %750 = vmatprep.subr.mxu0 %v679
        %751 = vmatpush1.xpose.msra.mxu0 %v678
        %752 = vmatprep.subr.mxu0 %v681
        %753 = vmatpush1.xpose.msra.mxu0 %v680
        %754 = vmatprep.subr.mxu0 %v683
        %755 = vmatpush1.xpose.msra.mxu0 %v682
        %756 = vmatprep.subr.mxu0 %v685
        %757 = vmatpush1.xpose.msra.mxu0 %v684
        %758 = vmatprep.subr.mxu0 %v687
        %759 = vmatpush1.xpose.msra.mxu0 %v686
        %760 = vmatprep.subr.mxu0 %v689
        %761 = vmatpush1.xpose.msra.mxu0 %v688
        %762 = vmatprep.subr.mxu0 %v691
        %763 = vmatpush1.xpose.msra.mxu0 %v690
        %764 = vmatprep.subr.mxu0 %v693
        %765 = vmatpush1.xpose.msra.mxu0 %v692
        %766 = vmatprep.subr.mxu0 %v695
        %767 = vmatpush1.xpose.msra.mxu0 %v694
        %768 = vmatprep.subr.mxu0 %v697
        %769 = vmatpush1.xpose.msra.mxu0 %v696
        %770 = vmatprep.subr.mxu0 %v699
        %771 = vmatpush1.xpose.msra.mxu0 %v698
        %772 = vmatprep.subr.mxu0 %v701
        %773 = vmatpush1.xpose.msra.mxu0 %v700
        %774 = vmatprep.subr.mxu0 %v703
        %775 = vmatpush1.xpose.msra.mxu0 %v702
        %776 = vmatprep.subr.mxu0 %v705
        %777 = vmatpush1.xpose.msra.mxu0 %v704
        %778 = vmatprep.subr.mxu0 %v707
        %779 = vmatpush1.xpose.msra.mxu0 %v706
        %780 = vmatprep.subr.mxu0 %v709
        %781 = vmatpush1.xpose.msra.mxu0 %v708
        %782 = vmatprep.subr.mxu0 %v711
        %783 = vmatpush1.xpose.msra.mxu0 %v710
        %784 = vmatprep.mubr.f32.mxu0 %v713
        %785 = vmatmul.mubr.f32.gmra.mrb[0].mxu0 %v712
        %v786 = vpop.f32.mrb[0].mxu0
        %v787 = vadd.f32 0.0, %v786
        %v788 = vpop.f32.mrb[0].mxu0
        %v789 = vadd.f32 0.0, %v788
        %790 = vmatprep.mubr.f32.mxu0 %v715
        %791 = vmatmul.mubr.f32.gmra.mrb[0].mxu0 %v714
        %v792 = vpop.f32.mrb[0].mxu0
        %v793 = vadd.f32 0.0, %v792
        %v794 = vpop.f32.mrb[0].mxu0
        %v795 = vadd.f32 0.0, %v794
        %796 = vdwg.mxu0
        %v797 = vadd.f32 %v716, %v787
        %v798 = vadd.f32 %v717, %v789
        %v799 = vadd.f32 %v718, %v793
        %v800 = vadd.f32 %v719, %v795
        %801 = vst [vmem:[#allocation2] sm:$0xff] %v797
        %802 = vst [vmem:[#allocation2 + $0x8] sm:$0xff] %v798
        %803 = vst [vmem:[#allocation2 + $0x10] sm:$0xff] %v799
        %804 = vst [vmem:[#allocation2 + $0x18] sm:$0xff] %v800
        %p805 = scmp.eq.s32.totalorder %s34, 1
        // Predicated region
        $region57: #{tpu_custom_call.1} parent=35 // pred_check
          %p806 = pneg %p805
        $region58: #{tpu_custom_call.1} parent=35 // pred_check_branch
          %808 = sbr.rel (%p806) target = $region60
        $region59: #{tpu_custom_call.1} parent=35 // pred_region
          %v809 = vld [vmem:[#allocation2] sm:$0xff]
          %v810 = vld [vmem:[#allocation2 + $0x8] sm:$0xff]
          %v811 = vld [vmem:[#allocation2 + $0x10] sm:$0xff]
          %v812 = vld [vmem:[#allocation2 + $0x18] sm:$0xff]
          %813 = vst [vmem:[%s373] sm:$0xff] %v809
          %814 = vst [vmem:[%s373 + $0x8] sm:$0xff] %v810
          %815 = vst [vmem:[%s373 + $0x10] sm:$0xff] %v811
          %816 = vst [vmem:[%s373 + $0x18] sm:$0xff] %v812
        $region60: #{tpu_custom_call.1} parent=35 // pred_fallthru
          _
        %s817 = sand.u32 %s168, 1
        %s818 = scalar_lea.sflag [#allocation5], %s817
        %s819 = sand.u32 %s168, 1
        %s820 = smul.addr %s819, 32
        %s821 = scalar_lea.vmem [#allocation11], %s820
        // Predicated region
        $region61: #{tpu_custom_call.1} parent=35 // pred_check
          %p822 = pneg %p178
        $region62: #{tpu_custom_call.1} parent=35 // pred_check_branch
          %824 = sbr.rel (%p822) target = $region64
        $region63: #{tpu_custom_call.1} parent=35 // pred_region
          %s825 = smul.u32 2, %s32
          %s826 = smul.u32 2, %s33
          %s828 = ssub.s32 512, 512
          %829 = vsyncadd %s818, %s828
          %s830 = smul.addr %s825, 4
          %s831 = sadd.s32 %s826, %s830
          %s832 = smul.addr %s831, 128
          %s833 = scalar_lea.hbm %s4, %s832
          %s834 = sshll.u32 %s821, 4
          %s835 = int_to_ptr.vmem [resolvable:$true] %s834
          %840 = dma.vmem_to_hbm [thread:$0]  %s835, 512, %s833, %s818, 256, 512, 16
        $region64: #{tpu_custom_call.1} parent=35 // pred_fallthru
          _
      $region36: #{tpu_custom_call.1} parent=5 // pred_fallthru
        _
      %p841 = scmp.le.s32.totalorder 2, %s22
      // Predicated region
      $region65: #{tpu_custom_call.1} parent=5 // pred_check
        %p842 = pneg %p841
      $region66: #{tpu_custom_call.1} parent=5 // pred_check_branch
        %844 = sbr.rel (%p842) target = $region68
      $region67: #{tpu_custom_call.1} parent=5 // pred_region
        %s845 = ssub.s32 %s22, 2
        // Predicated region
        $region69: #{tpu_custom_call.1} parent=67 // pred_check
          %p846 = pneg %p184
        $region70: #{tpu_custom_call.1} parent=67 // pred_check_branch
          %848 = sbr.rel (%p846) target = $region72
        $region71: #{tpu_custom_call.1} parent=67 // pred_region
          %s849 = sand.u32 %s169, 1
          %s850 = scalar_lea.sflag [#allocation5], %s849
          %s851 = sand.u32 %s169, 1
          %s852 = smul.addr %s851, 32
          %s853 = scalar_lea.vmem [#allocation11], %s852
          %854 = dma.done %s850, 512
        $region72: #{tpu_custom_call.1} parent=67 // pred_fallthru
          _
      $region68: #{tpu_custom_call.1} parent=5 // pred_fallthru
        _
    $region6: #{tpu_custom_call.1} parent=1 // loop_footer
      %s26 = sadd.s32 1, %s22
    $region7: #{tpu_custom_call.1} parent=1 // loop_footer_branch
      %21 = sbr.rel target = $region3
    $region8: #{tpu_custom_call.1} parent=1 // loop_exit
      _
    %855 = vsyncpa [#allocation4], 1
    %s856 = scalar_lea.sflag [#allocation4], 1
    %857 = vsyncpa %s856, 1
    %858 = vsyncpa [#allocation7], 1
    %s859 = scalar_lea.sflag [#allocation7], 1
    %860 = vsyncpa %s859, 1
    %861 = vsyncpa [#allocation10], 1
    %s862 = scalar_lea.sflag [#allocation10], 1
    %863 = vsyncpa %s862, 1
    %864 = vsyncpa [#allocation5], 1
    %s865 = scalar_lea.sflag [#allocation5], 1
    %866 = vsyncpa %s865, 1

</llo_original>
